<compile_context>
chip_gen: v7x
topology: tpu7x:2x2x1
jax: 0.10.0
libtpu: 0.0.40
codegen_flags: <defaults>
</compile_context>

<pallas_src>
import jax
import jax.numpy as jnp
from jax import lax
from jax.experimental import pallas as pl
from jax.experimental.pallas import tpu as pltpu


def _norm_reg_l1_kernel(pred_ref,      # VMEM: (BB, C, K) gathered features, native dtype
                        target_ref,    # VMEM: (BB, C, K)
                        mask_ref,      # VMEM: (BB, 1, K)
                        partial_ref):  # VMEM out: (1, 1, 2) f32 -> [numerator, denominator]
    c = pred_ref.shape[1]

    pred = pred_ref[...].astype(jnp.float32)           # (BB, C, K)
    tgt = target_ref[...].astype(jnp.float32)          # (BB, C, K)
    m = mask_ref[...].astype(jnp.float32)              # (BB, 1, K) -> broadcasts over C

    p = pred / (tgt + 1e-4)
    # F.l1_loss(pred * mask, ones * mask, reduction='sum')
    num = jnp.sum(jnp.abs(p * m - m))
    # sum over the (B, K, C)-expanded mask == sum(mask) * C
    den = jnp.sum(m) * float(c)

    # Pack both scalars into the (1, 1, 2) output block with a single full-block
    # store (avoids per-element scalar stores into VMEM).
    lane = lax.broadcasted_iota(jnp.int32, (1, 1, 2), 2)
    partial_ref[...] = jnp.where(lane == 0, num, den)


def norm_reg_l1_loss(output, mask, ind, target):
    """output: (B, C, H, W) NCHW; mask: (B, K); ind: (B, K) int; target: (B, K, C)."""
    B, C, H, W = output.shape
    K = ind.shape[1]
    HW = H * W

    # Gather only the K indexed columns per batch directly from the NCHW layout:
    # (B, C, HW) --take_along_axis--> (B, C, K).  Only B*C*K feature elements are
    # ever materialized; no full-map transpose or upcast.
    feat = output.reshape(B, C, HW)
    ind32 = jnp.clip(ind.astype(jnp.int32), 0, HW - 1)          # guard silent OOB on TPU
    pred = jnp.take_along_axis(feat, ind32[:, None, :], axis=2)  # (B, C, K), native dtype

    target_ck = jnp.transpose(target, (0, 2, 1))                 # (B, C, K)  (tiny)
    mask_1k = mask.reshape(B, 1, K)                              # (B, 1, K)

    # Batch blocking: amortize the ~0.35 us/step grid overhead, but keep >= 2
    # independent blocks when B > 1 so the parallel grid can split across v7x
    # megacores.  Cap per-block bytes so double-buffered tiles stay well below
    # any scoped VMEM limit (v5e/v6e/v7x).
    per_batch_bytes = 2 * C * K * 4                              # pred + target, f32 bound
    bb_cap = max(1, (2 * 1024 * 1024) // max(per_batch_bytes, 1))
    BB = 1 if B == 1 else min(bb_cap, pl.cdiv(B, 2))
    G = pl.cdiv(B, BB)
    B_pad = G * BB

    if B_pad != B:
        padb = ((0, B_pad - B), (0, 0), (0, 0))
        pred = jnp.pad(pred, padb)
        target_ck = jnp.pad(target_ck, padb)
        mask_1k = jnp.pad(mask_1k, padb)                         # zero mask => zero contribution

    partials = pl.pallas_call(
        _norm_reg_l1_kernel,
        out_shape=jax.ShapeDtypeStruct((G, 1, 2), jnp.float32),
        grid=(G,),
        in_specs=[
            pl.BlockSpec((BB, C, K), lambda g: (g, 0, 0)),       # pred
            pl.BlockSpec((BB, C, K), lambda g: (g, 0, 0)),       # target
            pl.BlockSpec((BB, 1, K), lambda g: (g, 0, 0)),       # mask
        ],
        out_specs=pl.BlockSpec((1, 1, 2), lambda g: (g, 0, 0)),
        compiler_params=pltpu.CompilerParams(
            dimension_semantics=("parallel",)),                  # batch blocks independent
    )(pred, target_ck, mask_1k)

    num = jnp.sum(partials[:, 0, 0])
    den = jnp.sum(partials[:, 0, 1])
    return num / (den + 1e-4)


def _reference(output, mask, ind, target):
    """Pure-JAX reference mirroring the PyTorch module."""
    B, C, H, W = output.shape
    feat = jnp.transpose(output, (0, 2, 3, 1)).reshape(B, H * W, C)
    pred = jnp.take_along_axis(feat, ind[:, :, None].astype(jnp.int32), axis=1)  # (B,K,C)
    m = jnp.broadcast_to(mask.astype(jnp.float32)[:, :, None], pred.shape)
    p = pred / (target + 1e-4)
    loss = jnp.sum(jnp.abs(p * m - 1.0 * m))
    return loss / (jnp.sum(m) + 1e-4)


if __name__ == "__main__":
    B, C, H, W, K = 2, 4, 16, 16, 8
    key = jax.random.PRNGKey(0)
    k1, k2, k3, k4 = jax.random.split(key, 4)

    output = jax.random.normal(k1, (B, C, H, W), dtype=jnp.float32)
    ind = jax.random.randint(k2, (B, K), 0, H * W, dtype=jnp.int32)
    mask = (jax.random.uniform(k3, (B, K)) > 0.3).astype(jnp.float32)
    target = jax.random.uniform(k4, (B, K, C), minval=0.5, maxval=2.0,
                                dtype=jnp.float32)

    loss = norm_reg_l1_loss(output, mask, ind, target)
    loss = jax.block_until_ready(loss)

    ref = _reference(output, mask, ind, target)
    assert jnp.allclose(loss, ref, rtol=1e-5, atol=1e-6), (loss, ref)

    print("KERNEL_OK")
</pallas_src>

<mosaic_0001>
module attributes {stable_mosaic.version = 11 : i64} {
  func.func @_norm_reg_l1_kernel(%arg0: i32, %arg1: memref<1x4x8xf32, #tpu.memory_space<vmem>>, %arg2: memref<1x4x8xf32, #tpu.memory_space<vmem>>, %arg3: memref<1x1x8xf32, #tpu.memory_space<vmem>>, %arg4: memref<1x1x2xf32, #tpu.memory_space<vmem>>) attributes {dimension_semantics = [#tpu.dimension_semantics<parallel>], iteration_bounds = array<i64: 2>, scalar_prefetch = 0 : i64, scratch_operands = 0 : i64, tpu.core_type = #tpu.core_type<tc>, window_params = [{transform_indices = @transform_0, window_bounds = array<i64: 1, 4, 8>}, {transform_indices = @transform_1, window_bounds = array<i64: 1, 4, 8>}, {transform_indices = @transform_2, window_bounds = array<i64: 1, 1, 8>}, {transform_indices = @transform_3, window_bounds = array<i64: 1, 1, 2>}]} {
    %c0 = arith.constant 0 : index
    %c0_0 = arith.constant 0 : index
    %c0_1 = arith.constant 0 : index
    %0 = vector.load %arg1[%c0, %c0_0, %c0_1] : memref<1x4x8xf32, #tpu.memory_space<vmem>>, vector<1x4x8xf32>
    %c0_2 = arith.constant 0 : index
    %c0_3 = arith.constant 0 : index
    %c0_4 = arith.constant 0 : index
    %1 = vector.load %arg2[%c0_2, %c0_3, %c0_4] : memref<1x4x8xf32, #tpu.memory_space<vmem>>, vector<1x4x8xf32>
    %c0_5 = arith.constant 0 : index
    %c0_6 = arith.constant 0 : index
    %c0_7 = arith.constant 0 : index
    %2 = vector.load %arg3[%c0_5, %c0_6, %c0_7] : memref<1x1x8xf32, #tpu.memory_space<vmem>>, vector<1x1x8xf32>
    %cst = arith.constant 9.99999974E-5 : f32
    %3 = vector.broadcast %cst : f32 to vector<1x4x8xf32>
    %4 = arith.addf %1, %3 : vector<1x4x8xf32>
    %5 = arith.divf %0, %4 : vector<1x4x8xf32>
    %6 = vector.broadcast %2 : vector<1x1x8xf32> to vector<1x4x8xf32>
    %7 = arith.mulf %5, %6 : vector<1x4x8xf32>
    %8 = vector.broadcast %2 : vector<1x1x8xf32> to vector<1x4x8xf32>
    %9 = arith.subf %7, %8 : vector<1x4x8xf32>
    %10 = math.absf %9 : vector<1x4x8xf32>
    %11 = vector.shape_cast %10 : vector<1x4x8xf32> to vector<1x1x4x8xf32>
    %cst_8 = arith.constant dense<0.000000e+00> : vector<1xf32>
    %12 = vector.multi_reduction <add>, %11, %cst_8 [1, 2, 3] : vector<1x1x4x8xf32> to vector<1xf32>
    %13 = vector.shape_cast %12 : vector<1xf32> to vector<1x1x1x1xf32>
    %14 = vector.extract %13[0, 0, 0, 0] : f32 from vector<1x1x1x1xf32>
    %15 = vector.shape_cast %2 : vector<1x1x8xf32> to vector<1x1x1x8xf32>
    %cst_9 = arith.constant dense<0.000000e+00> : vector<1xf32>
    %16 = vector.multi_reduction <add>, %15, %cst_9 [1, 2, 3] : vector<1x1x1x8xf32> to vector<1xf32>
    %17 = vector.shape_cast %16 : vector<1xf32> to vector<1x1x1x1xf32>
    %18 = vector.extract %17[0, 0, 0, 0] : f32 from vector<1x1x1x1xf32>
    %cst_10 = arith.constant 4.000000e+00 : f32
    %19 = arith.mulf %18, %cst_10 : f32
    %20 = tpu.iota {dimensions = array<i32: 2>} : vector<1x1x2xi32>
    %c0_i32 = arith.constant 0 : i32
    %21 = vector.broadcast %c0_i32 : i32 to vector<1x1x2xi32>
    %22 = arith.cmpi eq, %20, %21 : vector<1x1x2xi32>
    %23 = vector.broadcast %14 : f32 to vector<1x1x2xf32>
    %24 = vector.broadcast %19 : f32 to vector<1x1x2xf32>
    %25 = arith.select %22, %23, %24 : vector<1x1x2xi1>, vector<1x1x2xf32>
    %c0_11 = arith.constant 0 : index
    %c0_12 = arith.constant 0 : index
    %c0_13 = arith.constant 0 : index
    %26 = vector.load %arg4[%c0_11, %c0_12, %c0_13] : memref<1x1x2xf32, #tpu.memory_space<vmem>>, vector<1x1x2xf32>
    tpu.vector_store %arg4[%c0_11, %c0_12, %c0_13], %25 {strides = array<i32>} : memref<1x1x2xf32, #tpu.memory_space<vmem>>, vector<1x1x2xf32>,
    return
  }
  func.func @transform_0(%arg0: i32) -> (i32, i32, i32) {
    %c0_i32 = arith.constant 0 : i32
    %c0_i32_0 = arith.constant 0 : i32
    %c0_i32_1 = arith.constant 0 : i32
    return %arg0, %c0_i32, %c0_i32_0 : i32, i32, i32
  }
  func.func @transform_1(%arg0: i32) -> (i32, i32, i32) {
    %c0_i32 = arith.constant 0 : i32
    %c0_i32_0 = arith.constant 0 : i32
    %c0_i32_1 = arith.constant 0 : i32
    return %arg0, %c0_i32, %c0_i32_0 : i32, i32, i32
  }
  func.func @transform_2(%arg0: i32) -> (i32, i32, i32) {
    %c0_i32 = arith.constant 0 : i32
    %c0_i32_0 = arith.constant 0 : i32
    %c0_i32_1 = arith.constant 0 : i32
    return %arg0, %c0_i32, %c0_i32_0 : i32, i32, i32
  }
  func.func @transform_3(%arg0: i32) -> (i32, i32, i32) {
    %c0_i32 = arith.constant 0 : i32
    %c0_i32_0 = arith.constant 0 : i32
    %c0_i32_1 = arith.constant 0 : i32
    return %arg0, %c0_i32, %c0_i32_0 : i32, i32, i32
  }
}

</mosaic_0001>

<llo_original>
// kernel: tpu_custom_call.1
$region0: #{tpu_custom_call.1}
  #allocation0 [shape = 'u32[]', space=smem, size = 0x4, offset = 0x4, fixed_abs, tag = 'smem constant byte address 0x4 - core index']
  #allocation1 [shape = 'u32[144,128]{1,0:T(1,128)}', space=vmem, size = 0x12000, scoped, tag = 'internal scratch']
  %s0 = inlined_call_operand.hbm [shape: f32[2,4,8], index: 0, kind: input, shape index: {}]
  %s1 = inlined_call_operand.hbm [shape: f32[2,4,8], index: 1, kind: input, shape index: {}]
  %s2 = inlined_call_operand.vmem [shape: f32[2,1,8], index: 2, kind: input, shape index: {}]
  %s3 = inlined_call_operand.hbm [shape: f32[2,1,2], index: 3, kind: output, shape index: {}]
  %s4 = sld [smem:[#allocation0]]
  $region53: #{tpu_custom_call.1} parent=0
    _
  %s6 = ssub.s32 1, %s4
  %s7 = scalar_select 0, %s6, %s4
  $region1: #{tpu_custom_call.1} parent=0
    #allocation2 [shape = 'u8[4096]{0}', space=vmem, size = 0x1000, scoped, tag = 'input window, operand 0']
    #allocation3 [shape = 's32[2]{0}', space=sflag, size = 0x8, scoped, tag = 'scoped memory for tpu_custom_call.1']
    #allocation4 [shape = 's32[2]{0}', space=sflag, size = 0x8, scoped, tag = 'scoped memory for tpu_custom_call.1']
    #allocation5 [shape = 'u8[4096]{0}', space=vmem, size = 0x1000, scoped, tag = 'input window, operand 1']
    #allocation6 [shape = 's32[2]{0}', space=sflag, size = 0x8, scoped, tag = 'scoped memory for tpu_custom_call.1']
    #allocation7 [shape = 'u8[1024]{0}', space=vmem, size = 0x400, scoped, tag = 'output window, operand 0']
    %8 = vsyncpa [#allocation3], 0
    %s9 = scalar_lea.sflag [#allocation3], 1
    %10 = vsyncpa %s9, 0
    %11 = vsyncpa [#allocation6], 0
    %s12 = scalar_lea.sflag [#allocation6], 1
    %13 = vsyncpa %s12, 0
    %14 = vsyncpa [#allocation4], 0
    %s15 = scalar_lea.sflag [#allocation4], 1
    %16 = vsyncpa %s15, 0
    loop: start=0, step=1, limit=4
    $region2: #{tpu_custom_call.1} parent=1 // loop_pre_header
      _
    $region3: #{tpu_custom_call.1} parent=1 // loop_header
      %s18 = sphi 0, %s22
      %p19 = scmp.ge.s32.totalorder %s18, 4
      %s28 = sphi 0, %s30
      %s31 = sphi 0, %s28
      %s32 = sphi 0, %s31
      %s48 = sphi 0, %s32
      %s54 = sphi 0, %s56
      %s57 = sphi 0, %s54
      %s58 = sphi 0, %s57
      %s74 = sphi 0, %s58
      %s80 = sphi 0, %s82
      %s83 = sphi 0, %s80
      %s84 = sphi 0, %s83
      %s100 = sphi 0, %s84
      %s106 = sphi 0, %s108
      %s109 = sphi 0, %s106
      %s110 = sphi 0, %s109
      %s126 = sphi 0, %s110
    $region4: #{tpu_custom_call.1} parent=1 // loop_header_branch
      %21 = sbr.rel (%p19) target = $region8
    $region5: #{tpu_custom_call.1} parent=1 // loop_body
      %s23 = ssub.s32 %s18, 1
      %s24 = ssub.s32 %s18, 2
      %s25 = sadd.s32 %s18, 1
      %s26 = ssub.s32 %s18, %s25
      %p27 = scmp.eq.s32.totalorder %s26, 0
      %s29 = sadd.s32 %s28, 1
      %s30 = scalar_select %p27, %s28, %s29
      %p33 = pneg %p27
      %p34 = scmp.eq.s32.totalorder %s18, 1
      %p35 = por %p33, %p34
      %p36 = scmp.ne.s32.totalorder %s28, %s31
      %p37 = scmp.eq.s32.totalorder %s18, 0
      %p38 = por %p36, %p37
      %p39 = scmp.ne.s32.totalorder %s28, %s31
      %p40 = scmp.eq.s32.totalorder %s23, 1
      %p41 = por %p39, %p40
      %p42 = scmp.ne.s32.totalorder %s31, %s32
      %p43 = scmp.eq.s32.totalorder %s23, 0
      %p44 = por %p42, %p43
      %p45 = scmp.ne.s32.totalorder %s31, %s32
      %p46 = scmp.eq.s32.totalorder %s24, 1
      %p47 = por %p45, %p46
      %p49 = scmp.ne.s32.totalorder %s32, %s48
      %p50 = scmp.eq.s32.totalorder %s24, 0
      %p51 = por %p49, %p50
      %s52 = ssub.s32 %s18, %s25
      %p53 = scmp.eq.s32.totalorder %s52, 0
      %s55 = sadd.s32 %s54, 1
      %s56 = scalar_select %p53, %s54, %s55
      %p59 = pneg %p53
      %p60 = scmp.eq.s32.totalorder %s18, 1
      %p61 = por %p59, %p60
      %p62 = scmp.ne.s32.totalorder %s54, %s57
      %p63 = scmp.eq.s32.totalorder %s18, 0
      %p64 = por %p62, %p63
      %p65 = scmp.ne.s32.totalorder %s54, %s57
      %p66 = scmp.eq.s32.totalorder %s23, 1
      %p67 = por %p65, %p66
      %p68 = scmp.ne.s32.totalorder %s57, %s58
      %p69 = scmp.eq.s32.totalorder %s23, 0
      %p70 = por %p68, %p69
      %p71 = scmp.ne.s32.totalorder %s57, %s58
      %p72 = scmp.eq.s32.totalorder %s24, 1
      %p73 = por %p71, %p72
      %p75 = scmp.ne.s32.totalorder %s58, %s74
      %p76 = scmp.eq.s32.totalorder %s24, 0
      %p77 = por %p75, %p76
      %s78 = ssub.s32 %s18, %s25
      %p79 = scmp.eq.s32.totalorder %s78, 0
      %s81 = sadd.s32 %s80, 1
      %s82 = scalar_select %p79, %s80, %s81
      %p85 = pneg %p79
      %p86 = scmp.eq.s32.totalorder %s18, 1
      %p87 = por %p85, %p86
      %p88 = scmp.ne.s32.totalorder %s80, %s83
      %p89 = scmp.eq.s32.totalorder %s18, 0
      %p90 = por %p88, %p89
      %p91 = scmp.ne.s32.totalorder %s80, %s83
      %p92 = scmp.eq.s32.totalorder %s23, 1
      %p93 = por %p91, %p92
      %p94 = scmp.ne.s32.totalorder %s83, %s84
      %p95 = scmp.eq.s32.totalorder %s23, 0
      %p96 = por %p94, %p95
      %p97 = scmp.ne.s32.totalorder %s83, %s84
      %p98 = scmp.eq.s32.totalorder %s24, 1
      %p99 = por %p97, %p98
      %p101 = scmp.ne.s32.totalorder %s84, %s100
      %p102 = scmp.eq.s32.totalorder %s24, 0
      %p103 = por %p101, %p102
      %s104 = ssub.s32 %s18, %s25
      %p105 = scmp.eq.s32.totalorder %s104, 0
      %s107 = sadd.s32 %s106, 1
      %s108 = scalar_select %p105, %s106, %s107
      %p111 = pneg %p105
      %p112 = scmp.eq.s32.totalorder %s18, 1
      %p113 = por %p111, %p112
      %p114 = scmp.ne.s32.totalorder %s106, %s109
      %p115 = scmp.eq.s32.totalorder %s18, 0
      %p116 = por %p114, %p115
      %p117 = scmp.ne.s32.totalorder %s106, %s109
      %p118 = scmp.eq.s32.totalorder %s23, 1
      %p119 = por %p117, %p118
      %p120 = scmp.ne.s32.totalorder %s109, %s110
      %p121 = scmp.eq.s32.totalorder %s23, 0
      %p122 = por %p120, %p121
      %p123 = scmp.ne.s32.totalorder %s109, %s110
      %p124 = scmp.eq.s32.totalorder %s24, 1
      %p125 = por %p123, %p124
      %p127 = scmp.ne.s32.totalorder %s110, %s126
      %p128 = scmp.eq.s32.totalorder %s24, 0
      %p129 = por %p127, %p128
      %p130 = scmp.le.s32.totalorder 1, %s18
      %p131 = scmp.lt.s32.totalorder %s18, 3
      %p132 = pnand %p130, %p131
      %p133 = pneg %p132
      // Predicated region
      $region9: #{tpu_custom_call.1} parent=5 // pred_check
        _
      $region10: #{tpu_custom_call.1} parent=5 // pred_check_branch
        %135 = sbr.rel (%p132) target = $region12
      $region11: #{tpu_custom_call.1} parent=5 // pred_region
        %s136 = ssub.s32 %s18, 1
      $region12: #{tpu_custom_call.1} parent=5 // pred_fallthru
        _
      %p137 = scmp.lt.s32.totalorder %s18, 2
      // Predicated region
      $region13: #{tpu_custom_call.1} parent=5 // pred_check
        %p138 = pneg %p137
      $region14: #{tpu_custom_call.1} parent=5 // pred_check_branch
        %140 = sbr.rel (%p138) target = $region16
      $region15: #{tpu_custom_call.1} parent=5 // pred_region
        // Predicated region
        $region17: #{tpu_custom_call.1} parent=15 // pred_check
          %p141 = pneg %p38
        $region18: #{tpu_custom_call.1} parent=15 // pred_check_branch
          %143 = sbr.rel (%p141) target = $region20
        $region19: #{tpu_custom_call.1} parent=15 // pred_region
          %s144 = sand.u32 %s28, 1
          %s145 = scalar_lea.sflag [#allocation3], %s144
          %s146 = sand.u32 %s28, 1
          %s147 = smul.addr %s146, 4
          %s148 = scalar_lea.vmem [#allocation2], %s147
          %s150 = ssub.s32 64, 64
          %151 = vsyncadd %s145, %s150
          %s152 = smul.addr %s18, 64
          %s153 = scalar_lea.hbm %s0, %s152
          %s155 = sshll.u32 %s148, 4
          %s156 = int_to_ptr.vmem [resolvable:$true] %s155
          %158 = dma.hbm_to_vmem [thread:$0]  %s153, 64, %s156, %s145
        $region20: #{tpu_custom_call.1} parent=15 // pred_fallthru
          _
        // Predicated region
        $region21: #{tpu_custom_call.1} parent=15 // pred_check
          %p159 = pneg %p64
        $region22: #{tpu_custom_call.1} parent=15 // pred_check_branch
          %161 = sbr.rel (%p159) target = $region24
        $region23: #{tpu_custom_call.1} parent=15 // pred_region
          %s162 = sand.u32 %s54, 1
          %s163 = scalar_lea.sflag [#allocation6], %s162
          %s164 = sand.u32 %s54, 1
          %s165 = smul.addr %s164, 4
          %s166 = scalar_lea.vmem [#allocation5], %s165
          %s168 = ssub.s32 64, 64
          %169 = vsyncadd %s163, %s168
          %s170 = smul.addr %s18, 64
          %s171 = scalar_lea.hbm %s1, %s170
          %s173 = sshll.u32 %s166, 4
          %s174 = int_to_ptr.vmem [resolvable:$true] %s173
          %176 = dma.hbm_to_vmem [thread:$0]  %s171, 64, %s174, %s163
        $region24: #{tpu_custom_call.1} parent=15 // pred_fallthru
          _
        // Predicated region
        $region25: #{tpu_custom_call.1} parent=15 // pred_check
          %p177 = pneg %p90
        $region26: #{tpu_custom_call.1} parent=15 // pred_check_branch
          %179 = sbr.rel (%p177) target = $region28
        $region27: #{tpu_custom_call.1} parent=15 // pred_region
          %p180 = scmp.lt.s32.totalorder %s18, 1
          %s181 = scalar_select %p180, %s18, 1
          %s182 = scalar_lea.vmem %s2, %s181
        $region28: #{tpu_custom_call.1} parent=15 // pred_fallthru
          _
      $region16: #{tpu_custom_call.1} parent=5 // pred_fallthru
        _
      %p183 = scmp.le.s32.totalorder 1, %s18
      %p184 = scmp.lt.s32.totalorder %s18, 3
      %p185 = pnand %p183, %p184
      %p186 = pneg %p185
      // Predicated region
      $region29: #{tpu_custom_call.1} parent=5 // pred_check
        _
      $region30: #{tpu_custom_call.1} parent=5 // pred_check_branch
        %188 = sbr.rel (%p185) target = $region32
      $region31: #{tpu_custom_call.1} parent=5 // pred_region
        %s189 = ssub.s32 %s18, 1
        %s190 = sand.u32 %s31, 1
        %s191 = scalar_lea.sflag [#allocation3], %s190
        %s192 = sand.u32 %s31, 1
        %s193 = smul.addr %s192, 4
        %s194 = scalar_lea.vmem [#allocation2], %s193
        // Predicated region
        $region33: #{tpu_custom_call.1} parent=31 // pred_check
          %p195 = pneg %p44
        $region34: #{tpu_custom_call.1} parent=31 // pred_check_branch
          %197 = sbr.rel (%p195) target = $region36
        $region35: #{tpu_custom_call.1} parent=31 // pred_region
          %198 = dma.done %s191, 64
        $region36: #{tpu_custom_call.1} parent=31 // pred_fallthru
          _
        %s199 = sand.u32 %s57, 1
        %s200 = scalar_lea.sflag [#allocation6], %s199
        %s201 = sand.u32 %s57, 1
        %s202 = smul.addr %s201, 4
        %s203 = scalar_lea.vmem [#allocation5], %s202
        // Predicated region
        $region37: #{tpu_custom_call.1} parent=31 // pred_check
          %p204 = pneg %p70
        $region38: #{tpu_custom_call.1} parent=31 // pred_check_branch
          %206 = sbr.rel (%p204) target = $region40
        $region39: #{tpu_custom_call.1} parent=31 // pred_region
          %207 = dma.done %s200, 64
        $region40: #{tpu_custom_call.1} parent=31 // pred_fallthru
          _
        %s208 = sand.u32 %s31, 1
        %s209 = scalar_lea.sflag [#allocation3], %s208
        %s210 = sand.u32 %s31, 1
        %s211 = smul.addr %s210, 4
        %s212 = scalar_lea.vmem [#allocation2], %s211
        %p213 = pneg %p44
        %p214 = pneg %p41
        %s215 = sand.u32 %s57, 1
        %s216 = scalar_lea.sflag [#allocation6], %s215
        %s217 = sand.u32 %s57, 1
        %s218 = smul.addr %s217, 4
        %s219 = scalar_lea.vmem [#allocation5], %s218
        %p220 = pneg %p70
        %p221 = pneg %p67
        %p222 = scmp.lt.s32.totalorder %s23, 1
        %s223 = scalar_select %p222, %s23, 1
        %s224 = scalar_lea.vmem %s2, %s223
        %p225 = pneg %p96
        %p226 = pneg %p93
        %p227 = pneg %p122
        %p228 = pneg %p119
        %s229 = sand.u32 %s109, 1
        %s230 = scalar_lea.sflag [#allocation4], %s229
        %s231 = sand.u32 %s109, 1
        %s232 = scalar_lea.vmem [#allocation7], %s231
        %p233 = scmp.lt.s32.totalorder %s23, 1
        %s234 = scalar_select %p233, %s23, 1
        %s235 = scalar_lea.vmem %s2, %s234
        %v236 = vld [vmem:[%s194] sm:$0xf]
        %v237 = vld [vmem:[%s203] sm:$0xf]
        %v238 = vld [vmem:[%s235] sm:$0x1]
        %v239 = vadd.f32 %v237, 0.0001
        %v240 = vrcp.pop %v239
        %v241 = vmul.f32 %v236, %v240
        %v243 = vlaneseq
        %v244 = vshrl.u32 %v243, 7
        %v245 = vsub.s32 0, %v244
        %v246 = vrot.slane %v238, %v245
        %v248 = vmul.f32 %v241, %v246
        %v249 = vsub.f32 %v248, %v246
        %v250 = vand.u32 2147483647, %v249
        %vm251 = vcmask 60416
        %v252 = vsel %vm251, %v250, 0.0
        %253 = vadd.xlane.f32.xlu0 %v252
        %v254 = vpop.xlane.xlu0 %253
        %v255 = vrot.slane %v254, 4
        %v256 = vadd.f32 %v254, %v255
        %v257 = vrot.slane %v256, 2
        %v258 = vadd.f32 %v256, %v257
        %v259 = vrot.slane %v258, 1
        %v260 = vadd.f32 %v258, %v259
        %s261 = vtos %v260
        %vm262 = vcmask 57344
        %v263 = vsel %vm262, %v238, 0.0
        %264 = vadd.xlane.f32.xlu0 %v263
        %v265 = vpop.xlane.xlu0 %264
        %v266 = vrot.slane %v265, 4
        %v267 = vadd.f32 %v265, %v266
        %v268 = vrot.slane %v267, 2
        %v269 = vadd.f32 %v267, %v268
        %v270 = vrot.slane %v269, 1
        %v271 = vadd.f32 %v269, %v270
        %s272 = vtos %v271
        %s273 = smul.f32 %s272, 4.0
        %v274 = vlaneseq
        %v275 = vand.u32 %v274, 127
        %vm276 = vcmp.eq.s32.totalorder %v275, 0
        %v277 = vstv %s261
        %v278 = vstv %s273
        %v279 = vsel %vm276, %v277, %v278
        %vm280 = vcmask 8192
        %281 = vst.msk [vmem:[%s232] sm:$0x1] %vm280, %v279
        %s282 = sand.u32 %s109, 1
        %s283 = scalar_lea.sflag [#allocation4], %s282
        %s284 = sand.u32 %s109, 1
        %s285 = scalar_lea.vmem [#allocation7], %s284
        // Predicated region
        $region41: #{tpu_custom_call.1} parent=31 // pred_check
          %p286 = pneg %p119
        $region42: #{tpu_custom_call.1} parent=31 // pred_check_branch
          %288 = sbr.rel (%p286) target = $region44
        $region43: #{tpu_custom_call.1} parent=31 // pred_region
          %s290 = ssub.s32 16, 16
          %291 = vsyncadd %s283, %s290
          %s292 = smul.addr %s23, 16
          %s293 = scalar_lea.hbm %s3, %s292
          %s295 = sshll.u32 %s285, 4
          %s296 = int_to_ptr.vmem [resolvable:$true] %s295
          %298 = dma.vmem_to_hbm [thread:$0]  %s296, 16, %s293, %s283
        $region44: #{tpu_custom_call.1} parent=31 // pred_fallthru
          _
      $region32: #{tpu_custom_call.1} parent=5 // pred_fallthru
        _
      %p299 = scmp.le.s32.totalorder 2, %s18
      // Predicated region
      $region45: #{tpu_custom_call.1} parent=5 // pred_check
        %p300 = pneg %p299
      $region46: #{tpu_custom_call.1} parent=5 // pred_check_branch
        %302 = sbr.rel (%p300) target = $region48
      $region47: #{tpu_custom_call.1} parent=5 // pred_region
        %s303 = ssub.s32 %s18, 2
        // Predicated region
        $region49: #{tpu_custom_call.1} parent=47 // pred_check
          %p304 = pneg %p125
        $region50: #{tpu_custom_call.1} parent=47 // pred_check_branch
          %306 = sbr.rel (%p304) target = $region52
        $region51: #{tpu_custom_call.1} parent=47 // pred_region
          %s307 = sand.u32 %s110, 1
          %s308 = scalar_lea.sflag [#allocation4], %s307
          %s309 = sand.u32 %s110, 1
          %s310 = scalar_lea.vmem [#allocation7], %s309
          %311 = dma.done %s308, 16
        $region52: #{tpu_custom_call.1} parent=47 // pred_fallthru
          _
      $region48: #{tpu_custom_call.1} parent=5 // pred_fallthru
        _
    $region6: #{tpu_custom_call.1} parent=1 // loop_footer
      %s22 = sadd.s32 1, %s18
    $region7: #{tpu_custom_call.1} parent=1 // loop_footer_branch
      %17 = sbr.rel target = $region3
    $region8: #{tpu_custom_call.1} parent=1 // loop_exit
      _
    %312 = vsyncpa [#allocation3], 1
    %s313 = scalar_lea.sflag [#allocation3], 1
    %314 = vsyncpa %s313, 1
    %315 = vsyncpa [#allocation6], 1
    %s316 = scalar_lea.sflag [#allocation6], 1
    %317 = vsyncpa %s316, 1
    %318 = vsyncpa [#allocation4], 1
    %s319 = scalar_lea.sflag [#allocation4], 1
    %320 = vsyncpa %s319, 1

</llo_original>
